<compile_context>
chip_gen: v6e
topology: v6e:2x2x1
jax: 0.10.0
libtpu: 0.0.40
codegen_flags: <defaults>
</compile_context>

<pallas_src>
import jax
import jax.numpy as jnp
from jax.experimental import pallas as pl
from jax.experimental.pallas import tpu as pltpu


def _round_up(n: int, m: int) -> int:
    return ((n + m - 1) // m) * m


def _make_kernel(state_dim, action_dim, s_seg, p1_bias_row,
                 h1_fused, h1_bias_row, h2_fused, h2_bias_row):
    """Fused twin-MLP kernel; all slice offsets are static Python ints."""

    def kernel(state_ref, action_ref, p1_ref, p2_ref, p3_ref, q_ref):
        s = state_ref[...].astype(jnp.float32)
        a = action_ref[...].astype(jnp.float32)

        # ---- Layer 1 (fused twin): W1 stored as two 8-aligned row segments
        # (state part at row 0, action part at row s_seg) + bias row.
        h = (
            jnp.dot(s, p1_ref[0:state_dim, :], preferred_element_type=jnp.float32)
            + jnp.dot(a, p1_ref[s_seg:s_seg + action_dim, :],
                      preferred_element_type=jnp.float32)
            + p1_ref[p1_bias_row:p1_bias_row + 1, :]
        )
        h = jnp.maximum(h, 0.0)

        # ---- Layer 2 (block-diagonal fused twin)
        h = (
            jnp.dot(h, p2_ref[0:h1_fused, :], preferred_element_type=jnp.float32)
            + p2_ref[h1_bias_row:h1_bias_row + 1, :]
        )
        h = jnp.maximum(h, 0.0)

        # ---- Layer 3 (block-diagonal fused twin, no activation) -> (tb, 2)
        q_ref[...] = (
            jnp.dot(h, p3_ref[0:h2_fused, :], preferred_element_type=jnp.float32)
            + p3_ref[h2_bias_row:h2_bias_row + 1, :]
        ).astype(q_ref.dtype)

    return kernel


def critic_sac_forward(state, action, packed):
    """Fused twin-critic forward.  Returns (q1, q2), each (B, 1)."""
    B, state_dim = state.shape
    action_dim = action.shape[1]
    p1, p2, p3 = packed["p1"], packed["p2"], packed["p3"]

    s_seg = packed["s_seg"]                 # 8-aligned start of the action segment in p1
    p1_bias_row = p1.shape[0] - 1
    h1_fused = p1.shape[1]                  # 2 * hidden1
    h1_bias_row = p2.shape[0] - 1
    h2_fused = p2.shape[1]                  # 2 * hidden2
    h2_bias_row = p3.shape[0] - 1

    kernel = _make_kernel(state_dim, action_dim, s_seg, p1_bias_row,
                          h1_fused, h1_bias_row, h2_fused, h2_bias_row)

    # Batch tiling: single full block when small, 256-row blocks when large.
    tb = B if B <= 256 else 256
    grid = (pl.cdiv(B, tb),)

    in_dim = state_dim + action_dim
    flops = 2 * B * (in_dim * h1_fused + h1_fused * h2_fused + h2_fused * 2)
    bytes_accessed = 4 * (state.size + action.size + p1.size + p2.size + p3.size + B * 2)

    q = pl.pallas_call(
        kernel,
        out_shape=jax.ShapeDtypeStruct((B, 2), jnp.float32),
        grid=grid,
        in_specs=[
            pl.BlockSpec((tb, state_dim), lambda i: (i, 0)),
            pl.BlockSpec((tb, action_dim), lambda i: (i, 0)),
            pl.BlockSpec(p1.shape, lambda i: (0, 0)),
            pl.BlockSpec(p2.shape, lambda i: (0, 0)),
            pl.BlockSpec(p3.shape, lambda i: (0, 0)),
        ],
        out_specs=pl.BlockSpec((tb, 2), lambda i: (i, 0)),
        compiler_params=pltpu.CompilerParams(
            dimension_semantics=("parallel",),
        ),
        cost_estimate=pl.CostEstimate(
            flops=flops, transcendentals=0, bytes_accessed=bytes_accessed
        ),
    )(state, action, p1, p2, p3)

    # glue: slice the lane-contiguous (B, 2) output into the module's two heads
    return q[:, 0:1], q[:, 1:2]


def init_params(key, state_dim, action_dim, dims):
    """Deterministic synthetic init; shapes match the PyTorch module (W as (in, out))."""
    sizes = [state_dim + action_dim, *dims, 1]
    params = {}
    keys = jax.random.split(key, 2 * (len(sizes) - 1))
    ki = 0
    for net in (1, 2):
        for li, (d_in, d_out) in enumerate(zip(sizes[:-1], sizes[1:]), start=1):
            scale = 1.0 / jnp.sqrt(jnp.float32(d_in))
            params[f"w{net}{li}"] = (
                jax.random.uniform(keys[ki], (d_in, d_out), jnp.float32, -1.0, 1.0) * scale
            )
            params[f"b{net}{li}"] = jnp.zeros((1, d_out), jnp.float32)
            ki += 1
    return params


def pack_params(params, state_dim, action_dim, dims):
    """Fuse twin-net weights (lane-concat / block-diag), split layer-1 rows into
    8-aligned state/action segments, and append the bias as a trailing sublane-
    aligned row of each layer's buffer.  Done once, outside the kernel."""
    h1, h2 = dims
    s_pad = _round_up(state_dim, 8)
    a_pad = _round_up(action_dim, 8)

    # Layer 1: outputs of the two nets concatenated along the lane axis.
    w1 = jnp.concatenate([params["w11"], params["w21"]], axis=1)          # (in, 2h1)
    b1 = jnp.concatenate([params["b11"], params["b21"]], axis=1)          # (1, 2h1)
    w1_s = jnp.pad(w1[:state_dim], ((0, s_pad - state_dim), (0, 0)))      # (s_pad, 2h1)
    w1_a = jnp.pad(w1[state_dim:], ((0, a_pad - action_dim), (0, 0)))     # (a_pad, 2h1)
    p1 = jnp.concatenate([w1_s, w1_a, b1], axis=0)                        # bias row is 8-aligned

    def pack(w, b):
        rows_pad = _round_up(w.shape[0], 8)
        w = jnp.pad(w, ((0, rows_pad - w.shape[0]), (0, 0)))
        return jnp.concatenate([w, b], axis=0)

    # Layers 2/3: block-diagonal so the two halves never mix.
    w2 = jnp.block([[params["w12"], jnp.zeros((h1, h2), jnp.float32)],
                    [jnp.zeros((h1, h2), jnp.float32), params["w22"]]])   # (2h1, 2h2)
    b2 = jnp.concatenate([params["b12"], params["b22"]], axis=1)          # (1, 2h2)
    w3 = jnp.block([[params["w13"], jnp.zeros((h2, 1), jnp.float32)],
                    [jnp.zeros((h2, 1), jnp.float32), params["w23"]]])    # (2h2, 2)
    b3 = jnp.concatenate([params["b13"], params["b23"]], axis=1)          # (1, 2)

    return {"p1": p1, "p2": pack(w2, b2), "p3": pack(w3, b3), "s_seg": s_pad}


def _reference_forward(state, action, params):
    """Pure-JAX reference on the UNFUSED parameters (validates the fusion too)."""
    sa = jnp.concatenate([state, action], axis=-1)

    def mlp(n):
        h = jnp.maximum(sa @ params[f"w{n}1"] + params[f"b{n}1"], 0.0)
        h = jnp.maximum(h @ params[f"w{n}2"] + params[f"b{n}2"], 0.0)
        return h @ params[f"w{n}3"] + params[f"b{n}3"]

    return mlp(1), mlp(2)


if __name__ == "__main__":
    # Small shapes consistent with the module's forward.
    B, state_dim, action_dim = 4, 16, 8
    dims = [32, 32]

    key = jax.random.PRNGKey(0)
    k_s, k_a, k_p = jax.random.split(key, 3)
    state = jax.random.normal(k_s, (B, state_dim), jnp.float32)
    action = jax.random.normal(k_a, (B, action_dim), jnp.float32)

    params = init_params(k_p, state_dim, action_dim, dims)
    packed = pack_params(params, state_dim, action_dim, dims)

    q1, q2 = critic_sac_forward(state, action, packed)
    jax.block_until_ready((q1, q2))

    r1, r2 = _reference_forward(state, action, params)
    assert q1.shape == (B, 1) and q2.shape == (B, 1)
    assert jnp.allclose(q1, r1, atol=1e-4, rtol=1e-4)
    assert jnp.allclose(q2, r2, atol=1e-4, rtol=1e-4)

    print("KERNEL_OK")
</pallas_src>

<mosaic_0001>
module attributes {stable_mosaic.version = 11 : i64} {
  func.func @kernel(%arg0: i32, %arg1: memref<4x16xf32, #tpu.memory_space<vmem>>, %arg2: memref<4x8xf32, #tpu.memory_space<vmem>>, %arg3: memref<25x64xf32, #tpu.memory_space<vmem>>, %arg4: memref<65x64xf32, #tpu.memory_space<vmem>>, %arg5: memref<65x2xf32, #tpu.memory_space<vmem>>, %arg6: memref<4x2xf32, #tpu.memory_space<vmem>>) attributes {dimension_semantics = [#tpu.dimension_semantics<parallel>], iteration_bounds = array<i64: 1>, scalar_prefetch = 0 : i64, scratch_operands = 0 : i64, tpu.core_type = #tpu.core_type<tc>, window_params = [{transform_indices = @transform_0, window_bounds = array<i64: 4, 16>}, {transform_indices = @transform_1, window_bounds = array<i64: 4, 8>}, {pipeline_mode = #tpu.pipeline_mode<synchronous>, transform_indices = @transform_2, window_bounds = array<i64: 25, 64>}, {pipeline_mode = #tpu.pipeline_mode<synchronous>, transform_indices = @transform_3, window_bounds = array<i64: 65, 64>}, {pipeline_mode = #tpu.pipeline_mode<synchronous>, transform_indices = @transform_4, window_bounds = array<i64: 65, 2>}, {transform_indices = @transform_5, window_bounds = array<i64: 4, 2>}]} {
    %c0 = arith.constant 0 : index
    %c0_0 = arith.constant 0 : index
    %0 = vector.load %arg1[%c0, %c0_0] : memref<4x16xf32, #tpu.memory_space<vmem>>, vector<4x16xf32>
    %c0_1 = arith.constant 0 : index
    %c0_2 = arith.constant 0 : index
    %1 = vector.load %arg2[%c0_1, %c0_2] : memref<4x8xf32, #tpu.memory_space<vmem>>, vector<4x8xf32>
    %c0_3 = arith.constant 0 : index
    %c0_4 = arith.constant 0 : index
    %2 = vector.load %arg3[%c0_3, %c0_4] : memref<25x64xf32, #tpu.memory_space<vmem>>, vector<16x64xf32>
    %cst = arith.constant dense<0.000000e+00> : vector<4x64xf32>
    %3 = tpu.matmul %0, %2, %cst {dimension_numbers = #tpu.dot_dimension_numbers<[1], [0], [0], [1], [0, 0, 1, 1], [], []>} : vector<4x16xf32>, vector<16x64xf32>, vector<4x64xf32> -> vector<4x64xf32>
    %c16 = arith.constant 16 : index
    %c0_5 = arith.constant 0 : index
    %4 = vector.load %arg3[%c16, %c0_5] : memref<25x64xf32, #tpu.memory_space<vmem>>, vector<8x64xf32>
    %cst_6 = arith.constant dense<0.000000e+00> : vector<4x64xf32>
    %5 = tpu.matmul %1, %4, %cst_6 {dimension_numbers = #tpu.dot_dimension_numbers<[1], [0], [0], [1], [0, 0, 1, 1], [], []>} : vector<4x8xf32>, vector<8x64xf32>, vector<4x64xf32> -> vector<4x64xf32>
    %6 = arith.addf %3, %5 : vector<4x64xf32>
    %c24 = arith.constant 24 : index
    %c0_7 = arith.constant 0 : index
    %7 = vector.load %arg3[%c24, %c0_7] : memref<25x64xf32, #tpu.memory_space<vmem>>, vector<1x64xf32>
    %8 = vector.broadcast %7 : vector<1x64xf32> to vector<4x64xf32>
    %9 = arith.addf %6, %8 : vector<4x64xf32>
    %cst_8 = arith.constant 0.000000e+00 : f32
    %10 = vector.broadcast %cst_8 : f32 to vector<4x64xf32>
    %11 = arith.maximumf %9, %10 : vector<4x64xf32>
    %c0_9 = arith.constant 0 : index
    %c0_10 = arith.constant 0 : index
    %12 = vector.load %arg4[%c0_9, %c0_10] : memref<65x64xf32, #tpu.memory_space<vmem>>, vector<64x64xf32>
    %cst_11 = arith.constant dense<0.000000e+00> : vector<4x64xf32>
    %13 = tpu.matmul %11, %12, %cst_11 {dimension_numbers = #tpu.dot_dimension_numbers<[1], [0], [0], [1], [0, 0, 1, 1], [], []>} : vector<4x64xf32>, vector<64x64xf32>, vector<4x64xf32> -> vector<4x64xf32>
    %c64 = arith.constant 64 : index
    %c0_12 = arith.constant 0 : index
    %14 = vector.load %arg4[%c64, %c0_12] : memref<65x64xf32, #tpu.memory_space<vmem>>, vector<1x64xf32>
    %15 = vector.broadcast %14 : vector<1x64xf32> to vector<4x64xf32>
    %16 = arith.addf %13, %15 : vector<4x64xf32>
    %cst_13 = arith.constant 0.000000e+00 : f32
    %17 = vector.broadcast %cst_13 : f32 to vector<4x64xf32>
    %18 = arith.maximumf %16, %17 : vector<4x64xf32>
    %c0_14 = arith.constant 0 : index
    %c0_15 = arith.constant 0 : index
    %19 = vector.load %arg5[%c0_14, %c0_15] : memref<65x2xf32, #tpu.memory_space<vmem>>, vector<64x2xf32>
    %cst_16 = arith.constant dense<0.000000e+00> : vector<4x2xf32>
    %20 = tpu.matmul %18, %19, %cst_16 {dimension_numbers = #tpu.dot_dimension_numbers<[1], [0], [0], [1], [0, 0, 1, 1], [], []>} : vector<4x64xf32>, vector<64x2xf32>, vector<4x2xf32> -> vector<4x2xf32>
    %c64_17 = arith.constant 64 : index
    %c0_18 = arith.constant 0 : index
    %21 = vector.load %arg5[%c64_17, %c0_18] : memref<65x2xf32, #tpu.memory_space<vmem>>, vector<1x2xf32>
    %22 = vector.broadcast %21 : vector<1x2xf32> to vector<4x2xf32>
    %23 = arith.addf %20, %22 : vector<4x2xf32>
    %c0_19 = arith.constant 0 : index
    %c0_20 = arith.constant 0 : index
    %24 = vector.load %arg6[%c0_19, %c0_20] : memref<4x2xf32, #tpu.memory_space<vmem>>, vector<4x2xf32>
    tpu.vector_store %arg6[%c0_19, %c0_20], %23 {strides = array<i32>} : memref<4x2xf32, #tpu.memory_space<vmem>>, vector<4x2xf32>,
    return
  }
  func.func @transform_0(%arg0: i32) -> (i32, i32) {
    %c0_i32 = arith.constant 0 : i32
    %c0_i32_0 = arith.constant 0 : i32
    return %arg0, %c0_i32 : i32, i32
  }
  func.func @transform_1(%arg0: i32) -> (i32, i32) {
    %c0_i32 = arith.constant 0 : i32
    %c0_i32_0 = arith.constant 0 : i32
    return %arg0, %c0_i32 : i32, i32
  }
  func.func @transform_2(%arg0: i32) -> (i32, i32) {
    %c0_i32 = arith.constant 0 : i32
    %c0_i32_0 = arith.constant 0 : i32
    %c0_i32_1 = arith.constant 0 : i32
    return %c0_i32, %c0_i32_0 : i32, i32
  }
  func.func @transform_3(%arg0: i32) -> (i32, i32) {
    %c0_i32 = arith.constant 0 : i32
    %c0_i32_0 = arith.constant 0 : i32
    %c0_i32_1 = arith.constant 0 : i32
    return %c0_i32, %c0_i32_0 : i32, i32
  }
  func.func @transform_4(%arg0: i32) -> (i32, i32) {
    %c0_i32 = arith.constant 0 : i32
    %c0_i32_0 = arith.constant 0 : i32
    %c0_i32_1 = arith.constant 0 : i32
    return %c0_i32, %c0_i32_0 : i32, i32
  }
  func.func @transform_5(%arg0: i32) -> (i32, i32) {
    %c0_i32 = arith.constant 0 : i32
    %c0_i32_0 = arith.constant 0 : i32
    return %arg0, %c0_i32 : i32, i32
  }
}

</mosaic_0001>

<llo_original>
// kernel: tpu_custom_call.1
$region0: #{tpu_custom_call.1}
  #allocation0 [shape = 'u32[]', space=smem, size = 0x4, offset = 0x4, fixed_abs, tag = 'smem constant byte address 0x4 - core index']
  #allocation1 [shape = 'u32[144,128]{1,0:T(1,128)}', space=vmem, size = 0x12000, scoped, tag = 'internal scratch']
  %s0 = inlined_call_operand.vmem [shape: f32[4,16], index: 0, kind: input, shape index: {}]
  %s1 = inlined_call_operand.vmem [shape: f32[4,8], index: 1, kind: input, shape index: {}]
  %s2 = inlined_call_operand.vmem [shape: f32[25,64], index: 2, kind: input, shape index: {}]
  %s3 = inlined_call_operand.vmem [shape: f32[65,64], index: 3, kind: input, shape index: {}]
  %s4 = inlined_call_operand.vmem [shape: f32[65,2], index: 4, kind: input, shape index: {}]
  %s5 = inlined_call_operand.vmem [shape: f32[4,2], index: 5, kind: output, shape index: {}]
  %s6 = sld [smem:[#allocation0]]
  $region30: #{tpu_custom_call.1} parent=0
    _
  %s8 = ssub.s32 1, %s6
  %s9 = scalar_select 0, %s8, %s6
  // Predicated region
  $region2: #{tpu_custom_call.1} parent=0 // pred_check
    _
  $region3: #{tpu_custom_call.1} parent=0 // pred_check_branch
    %11 = sbr.rel (0) target = $region5
  $region4: #{tpu_custom_call.1} parent=0 // pred_region
    _
  $region5: #{tpu_custom_call.1} parent=0 // pred_fallthru
    _
  // Predicated region
  $region6: #{tpu_custom_call.1} parent=0 // pred_check
    _
  $region7: #{tpu_custom_call.1} parent=0 // pred_check_branch
    %13 = sbr.rel (0) target = $region9
  $region8: #{tpu_custom_call.1} parent=0 // pred_region
    _
  $region9: #{tpu_custom_call.1} parent=0 // pred_fallthru
    _
  // Predicated region
  $region10: #{tpu_custom_call.1} parent=0 // pred_check
    _
  $region11: #{tpu_custom_call.1} parent=0 // pred_check_branch
    %15 = sbr.rel (0) target = $region13
  $region12: #{tpu_custom_call.1} parent=0 // pred_region
    _
  $region13: #{tpu_custom_call.1} parent=0 // pred_fallthru
    _
  // Predicated region
  $region14: #{tpu_custom_call.1} parent=0 // pred_check
    _
  $region15: #{tpu_custom_call.1} parent=0 // pred_check_branch
    %17 = sbr.rel (0) target = $region17
  $region16: #{tpu_custom_call.1} parent=0 // pred_region
    _
  $region17: #{tpu_custom_call.1} parent=0 // pred_fallthru
    _
  // Predicated region
  $region18: #{tpu_custom_call.1} parent=0 // pred_check
    _
  $region19: #{tpu_custom_call.1} parent=0 // pred_check_branch
    %19 = sbr.rel (0) target = $region21
  $region20: #{tpu_custom_call.1} parent=0 // pred_region
    _
  $region21: #{tpu_custom_call.1} parent=0 // pred_fallthru
    _
  %v20 = vld [vmem:[%s0] sm:$0xf]
  %v21 = vld [vmem:[%s1] sm:$0xf]
  %v22 = vld [vmem:[%s2] sm:$0xff]
  %v23 = vld [vmem:[%s2 + $0x8] sm:$0xff]
  %v24 = vld [vmem:[%s2 + $0x10] sm:$0xff]
  %vm25 = vcmask 64512
  %v27 = vsel %vm25, %v21, 0
  %29 = vmatprep.subr.mxu0 0.0
  %30 = vmatpush1.msra.mxu0 0.0
  %31 = vmatprep.subr.mxu0 0.0
  %32 = vmatpush1.msra.mxu0 0.0
  %33 = vmatprep.subr.mxu0 0.0
  %34 = vmatpush1.msra.mxu0 0.0
  %35 = vmatprep.subr.mxu0 0.0
  %36 = vmatpush1.msra.mxu0 0.0
  %37 = vmatprep.subr.mxu0 0.0
  %38 = vmatpush1.msra.mxu0 0.0
  %39 = vmatprep.subr.mxu0 0.0
  %40 = vmatpush1.msra.mxu0 0.0
  %41 = vmatprep.subr.mxu0 0.0
  %42 = vmatpush1.msra.mxu0 0.0
  %43 = vmatprep.subr.mxu0 0.0
  %44 = vmatpush1.msra.mxu0 0.0
  %45 = vmatprep.subr.mxu0 0.0
  %46 = vmatpush1.msra.mxu0 0.0
  %47 = vmatprep.subr.mxu0 0.0
  %48 = vmatpush1.msra.mxu0 0.0
  %49 = vmatprep.subr.mxu0 0.0
  %50 = vmatpush1.msra.mxu0 0.0
  %51 = vmatprep.subr.mxu0 0.0
  %52 = vmatpush1.msra.mxu0 0.0
  %53 = vmatprep.subr.mxu0 0.0
  %54 = vmatpush1.msra.mxu0 0.0
  %55 = vmatprep.subr.mxu0 0.0
  %56 = vmatpush1.msra.mxu0 0.0
  %57 = vmatprep.subr.mxu0 0.0
  %58 = vmatpush1.msra.mxu0 0.0
  %59 = vmatprep.subr.mxu0 0.0
  %60 = vmatpush1.msra.mxu0 %v24
  %61 = vmatprep.subr.mxu0 0.0
  %62 = vmatpush2.msra.mxu0 0.0
  %63 = vmatprep.subr.mxu0 0.0
  %64 = vmatpush2.msra.mxu0 0.0
  %65 = vmatprep.subr.mxu0 0.0
  %66 = vmatpush2.msra.mxu0 0.0
  %67 = vmatprep.subr.mxu0 0.0
  %68 = vmatpush2.msra.mxu0 0.0
  %69 = vmatprep.subr.mxu0 0.0
  %70 = vmatpush2.msra.mxu0 0.0
  %71 = vmatprep.subr.mxu0 0.0
  %72 = vmatpush2.msra.mxu0 0.0
  %73 = vmatprep.subr.mxu0 0.0
  %74 = vmatpush2.msra.mxu0 0.0
  %75 = vmatprep.subr.mxu0 0.0
  %76 = vmatpush2.msra.mxu0 0.0
  %77 = vmatprep.subr.mxu0 0.0
  %78 = vmatpush2.msra.mxu0 0.0
  %79 = vmatprep.subr.mxu0 0.0
  %80 = vmatpush2.msra.mxu0 0.0
  %81 = vmatprep.subr.mxu0 0.0
  %82 = vmatpush2.msra.mxu0 0.0
  %83 = vmatprep.subr.mxu0 0.0
  %84 = vmatpush2.msra.mxu0 0.0
  %85 = vmatprep.subr.mxu0 0.0
  %86 = vmatpush2.msra.mxu0 0.0
  %87 = vmatprep.subr.mxu0 0.0
  %88 = vmatpush2.msra.mxu0 0.0
  %89 = vmatprep.subr.mxu0 0.0
  %90 = vmatpush2.msra.mxu0 0.0
  %91 = vmatprep.subr.mxu0 0.0
  %92 = vmatpush2.msra.mxu0 0.0
  %93 = vmatprep.mubr.f32.mxu0 0.0
  %94 = vmatmul.mubr.f32.gmra.mxu0 %v27
  %v95 = vpop.f32.mrf.mxu0
  %v96 = vadd.f32 0.0, %v95
  %v97 = vpop.f32.mrf.mxu0
  %98 = vdwg.mxu0
  %vm99 = vcmask 130048
  %v101 = vsel %vm99, %v20, 0
  %103 = vmatprep.subr.mxu0 0.0
  %104 = vmatpush1.msra.mxu0 0.0
  %105 = vmatprep.subr.mxu0 0.0
  %106 = vmatpush1.msra.mxu0 0.0
  %107 = vmatprep.subr.mxu0 0.0
  %108 = vmatpush1.msra.mxu0 0.0
  %109 = vmatprep.subr.mxu0 0.0
  %110 = vmatpush1.msra.mxu0 0.0
  %111 = vmatprep.subr.mxu0 0.0
  %112 = vmatpush1.msra.mxu0 0.0
  %113 = vmatprep.subr.mxu0 0.0
  %114 = vmatpush1.msra.mxu0 0.0
  %115 = vmatprep.subr.mxu0 0.0
  %116 = vmatpush1.msra.mxu0 0.0
  %117 = vmatprep.subr.mxu0 0.0
  %118 = vmatpush1.msra.mxu0 0.0
  %119 = vmatprep.subr.mxu0 0.0
  %120 = vmatpush1.msra.mxu0 0.0
  %121 = vmatprep.subr.mxu0 0.0
  %122 = vmatpush1.msra.mxu0 0.0
  %123 = vmatprep.subr.mxu0 0.0
  %124 = vmatpush1.msra.mxu0 0.0
  %125 = vmatprep.subr.mxu0 0.0
  %126 = vmatpush1.msra.mxu0 0.0
  %127 = vmatprep.subr.mxu0 0.0
  %128 = vmatpush1.msra.mxu0 0.0
  %129 = vmatprep.subr.mxu0 0.0
  %130 = vmatpush1.msra.mxu0 0.0
  %131 = vmatprep.subr.mxu0 0.0
  %132 = vmatpush1.msra.mxu0 %v23
  %133 = vmatprep.subr.mxu0 0.0
  %134 = vmatpush1.msra.mxu0 %v22
  %135 = vmatprep.subr.mxu0 0.0
  %136 = vmatpush2.msra.mxu0 0.0
  %137 = vmatprep.subr.mxu0 0.0
  %138 = vmatpush2.msra.mxu0 0.0
  %139 = vmatprep.subr.mxu0 0.0
  %140 = vmatpush2.msra.mxu0 0.0
  %141 = vmatprep.subr.mxu0 0.0
  %142 = vmatpush2.msra.mxu0 0.0
  %143 = vmatprep.subr.mxu0 0.0
  %144 = vmatpush2.msra.mxu0 0.0
  %145 = vmatprep.subr.mxu0 0.0
  %146 = vmatpush2.msra.mxu0 0.0
  %147 = vmatprep.subr.mxu0 0.0
  %148 = vmatpush2.msra.mxu0 0.0
  %149 = vmatprep.subr.mxu0 0.0
  %150 = vmatpush2.msra.mxu0 0.0
  %151 = vmatprep.subr.mxu0 0.0
  %152 = vmatpush2.msra.mxu0 0.0
  %153 = vmatprep.subr.mxu0 0.0
  %154 = vmatpush2.msra.mxu0 0.0
  %155 = vmatprep.subr.mxu0 0.0
  %156 = vmatpush2.msra.mxu0 0.0
  %157 = vmatprep.subr.mxu0 0.0
  %158 = vmatpush2.msra.mxu0 0.0
  %159 = vmatprep.subr.mxu0 0.0
  %160 = vmatpush2.msra.mxu0 0.0
  %161 = vmatprep.subr.mxu0 0.0
  %162 = vmatpush2.msra.mxu0 0.0
  %163 = vmatprep.subr.mxu0 0.0
  %164 = vmatpush2.msra.mxu0 0.0
  %165 = vmatprep.subr.mxu0 0.0
  %166 = vmatpush2.msra.mxu0 0.0
  %167 = vmatprep.mubr.f32.mxu0 0.0
  %168 = vmatmul.mubr.f32.gmra.mxu0 %v101
  %v169 = vpop.f32.mrf.mxu0
  %v170 = vadd.f32 %v96, %v169
  %v171 = vpop.f32.mrf.mxu0
  %172 = vdwg.mxu0
  %v173 = vld [vmem:[%s2 + $0x18] sm:$0x1]
  %v174 = vlaneseq
  %v175 = vshrl.u32 %v174, 7
  %v176 = vsub.s32 0, %v175
  %v177 = vrot.slane %v173, %v176
  %v178 = vadd.f32 %v170, %v177
  %v179 = vmax.f32 %v178, 0.0
  %v180 = vld [vmem:[%s3] sm:$0xff]
  %v181 = vld [vmem:[%s3 + $0x8] sm:$0xff]
  %v182 = vld [vmem:[%s3 + $0x10] sm:$0xff]
  %v183 = vld [vmem:[%s3 + $0x18] sm:$0xff]
  %v184 = vld [vmem:[%s3 + $0x20] sm:$0xff]
  %v185 = vld [vmem:[%s3 + $0x28] sm:$0xff]
  %v186 = vld [vmem:[%s3 + $0x30] sm:$0xff]
  %v187 = vld [vmem:[%s3 + $0x38] sm:$0xff]
  %v188 = vld [vmem:[%s3 + $0x40] sm:$0x1]
  %v189 = vlaneseq
  %v190 = vshrl.u32 %v189, 7
  %v191 = vsub.s32 0, %v190
  %v192 = vrot.slane %v188, %v191
  %vm193 = vcmask 523264
  %v195 = vsel %vm193, %v179, 0
  %197 = vmatprep.subr.mxu0 0.0
  %198 = vmatpush1.msra.mxu0 0.0
  %199 = vmatprep.subr.mxu0 0.0
  %200 = vmatpush1.msra.mxu0 0.0
  %201 = vmatprep.subr.mxu0 0.0
  %202 = vmatpush1.msra.mxu0 0.0
  %203 = vmatprep.subr.mxu0 0.0
  %204 = vmatpush1.msra.mxu0 0.0
  %205 = vmatprep.subr.mxu0 0.0
  %206 = vmatpush1.msra.mxu0 0.0
  %207 = vmatprep.subr.mxu0 0.0
  %208 = vmatpush1.msra.mxu0 0.0
  %209 = vmatprep.subr.mxu0 0.0
  %210 = vmatpush1.msra.mxu0 0.0
  %211 = vmatprep.subr.mxu0 0.0
  %212 = vmatpush1.msra.mxu0 0.0
  %213 = vmatprep.subr.mxu0 0.0
  %214 = vmatpush1.msra.mxu0 %v187
  %215 = vmatprep.subr.mxu0 0.0
  %216 = vmatpush1.msra.mxu0 %v186
  %217 = vmatprep.subr.mxu0 0.0
  %218 = vmatpush1.msra.mxu0 %v185
  %219 = vmatprep.subr.mxu0 0.0
  %220 = vmatpush1.msra.mxu0 %v184
  %221 = vmatprep.subr.mxu0 0.0
  %222 = vmatpush1.msra.mxu0 %v183
  %223 = vmatprep.subr.mxu0 0.0
  %224 = vmatpush1.msra.mxu0 %v182
  %225 = vmatprep.subr.mxu0 0.0
  %226 = vmatpush1.msra.mxu0 %v181
  %227 = vmatprep.subr.mxu0 0.0
  %228 = vmatpush1.msra.mxu0 %v180
  %229 = vmatprep.subr.mxu0 0.0
  %230 = vmatpush2.msra.mxu0 0.0
  %231 = vmatprep.subr.mxu0 0.0
  %232 = vmatpush2.msra.mxu0 0.0
  %233 = vmatprep.subr.mxu0 0.0
  %234 = vmatpush2.msra.mxu0 0.0
  %235 = vmatprep.subr.mxu0 0.0
  %236 = vmatpush2.msra.mxu0 0.0
  %237 = vmatprep.subr.mxu0 0.0
  %238 = vmatpush2.msra.mxu0 0.0
  %239 = vmatprep.subr.mxu0 0.0
  %240 = vmatpush2.msra.mxu0 0.0
  %241 = vmatprep.subr.mxu0 0.0
  %242 = vmatpush2.msra.mxu0 0.0
  %243 = vmatprep.subr.mxu0 0.0
  %244 = vmatpush2.msra.mxu0 0.0
  %245 = vmatprep.subr.mxu0 0.0
  %246 = vmatpush2.msra.mxu0 0.0
  %247 = vmatprep.subr.mxu0 0.0
  %248 = vmatpush2.msra.mxu0 0.0
  %249 = vmatprep.subr.mxu0 0.0
  %250 = vmatpush2.msra.mxu0 0.0
  %251 = vmatprep.subr.mxu0 0.0
  %252 = vmatpush2.msra.mxu0 0.0
  %253 = vmatprep.subr.mxu0 0.0
  %254 = vmatpush2.msra.mxu0 0.0
  %255 = vmatprep.subr.mxu0 0.0
  %256 = vmatpush2.msra.mxu0 0.0
  %257 = vmatprep.subr.mxu0 0.0
  %258 = vmatpush2.msra.mxu0 0.0
  %259 = vmatprep.subr.mxu0 0.0
  %260 = vmatpush2.msra.mxu0 0.0
  %261 = vmatprep.mubr.f32.mxu0 0.0
  %262 = vmatmul.mubr.f32.gmra.mxu0 %v195
  %v263 = vpop.f32.mrf.mxu0
  %v264 = vadd.f32 %v192, %v263
  %v265 = vpop.f32.mrf.mxu0
  %266 = vdwg.mxu0
  %v267 = vmax.f32 %v264, 0.0
  %v268 = vld [vmem:[%s4] sm:$0xff]
  %v269 = vld [vmem:[%s4 + $0x8] sm:$0xff]
  %v270 = vld [vmem:[%s4 + $0x10] sm:$0xff]
  %v271 = vld [vmem:[%s4 + $0x18] sm:$0xff]
  %v272 = vld [vmem:[%s4 + $0x20] sm:$0xff]
  %v273 = vld [vmem:[%s4 + $0x28] sm:$0xff]
  %v274 = vld [vmem:[%s4 + $0x30] sm:$0xff]
  %v275 = vld [vmem:[%s4 + $0x38] sm:$0xff]
  %v276 = vld [vmem:[%s4 + $0x40] sm:$0x1]
  %v277 = vlaneseq
  %v278 = vshrl.u32 %v277, 7
  %v279 = vsub.s32 0, %v278
  %v280 = vrot.slane %v276, %v279
  %v282 = vsel %vm193, %v267, 0
  %284 = vmatprep.subr.mxu0 0.0
  %285 = vmatpush1.msra.mxu0 0.0
  %286 = vmatprep.subr.mxu0 0.0
  %287 = vmatpush1.msra.mxu0 0.0
  %288 = vmatprep.subr.mxu0 0.0
  %289 = vmatpush1.msra.mxu0 0.0
  %290 = vmatprep.subr.mxu0 0.0
  %291 = vmatpush1.msra.mxu0 0.0
  %292 = vmatprep.subr.mxu0 0.0
  %293 = vmatpush1.msra.mxu0 0.0
  %294 = vmatprep.subr.mxu0 0.0
  %295 = vmatpush1.msra.mxu0 0.0
  %296 = vmatprep.subr.mxu0 0.0
  %297 = vmatpush1.msra.mxu0 0.0
  %298 = vmatprep.subr.mxu0 0.0
  %299 = vmatpush1.msra.mxu0 0.0
  %300 = vmatprep.subr.mxu0 0.0
  %301 = vmatpush1.msra.mxu0 %v275
  %302 = vmatprep.subr.mxu0 0.0
  %303 = vmatpush1.msra.mxu0 %v274
  %304 = vmatprep.subr.mxu0 0.0
  %305 = vmatpush1.msra.mxu0 %v273
  %306 = vmatprep.subr.mxu0 0.0
  %307 = vmatpush1.msra.mxu0 %v272
  %308 = vmatprep.subr.mxu0 0.0
  %309 = vmatpush1.msra.mxu0 %v271
  %310 = vmatprep.subr.mxu0 0.0
  %311 = vmatpush1.msra.mxu0 %v270
  %312 = vmatprep.subr.mxu0 0.0
  %313 = vmatpush1.msra.mxu0 %v269
  %314 = vmatprep.subr.mxu0 0.0
  %315 = vmatpush1.msra.mxu0 %v268
  %316 = vmatprep.subr.mxu0 0.0
  %317 = vmatpush2.msra.mxu0 0.0
  %318 = vmatprep.subr.mxu0 0.0
  %319 = vmatpush2.msra.mxu0 0.0
  %320 = vmatprep.subr.mxu0 0.0
  %321 = vmatpush2.msra.mxu0 0.0
  %322 = vmatprep.subr.mxu0 0.0
  %323 = vmatpush2.msra.mxu0 0.0
  %324 = vmatprep.subr.mxu0 0.0
  %325 = vmatpush2.msra.mxu0 0.0
  %326 = vmatprep.subr.mxu0 0.0
  %327 = vmatpush2.msra.mxu0 0.0
  %328 = vmatprep.subr.mxu0 0.0
  %329 = vmatpush2.msra.mxu0 0.0
  %330 = vmatprep.subr.mxu0 0.0
  %331 = vmatpush2.msra.mxu0 0.0
  %332 = vmatprep.subr.mxu0 0.0
  %333 = vmatpush2.msra.mxu0 0.0
  %334 = vmatprep.subr.mxu0 0.0
  %335 = vmatpush2.msra.mxu0 0.0
  %336 = vmatprep.subr.mxu0 0.0
  %337 = vmatpush2.msra.mxu0 0.0
  %338 = vmatprep.subr.mxu0 0.0
  %339 = vmatpush2.msra.mxu0 0.0
  %340 = vmatprep.subr.mxu0 0.0
  %341 = vmatpush2.msra.mxu0 0.0
  %342 = vmatprep.subr.mxu0 0.0
  %343 = vmatpush2.msra.mxu0 0.0
  %344 = vmatprep.subr.mxu0 0.0
  %345 = vmatpush2.msra.mxu0 0.0
  %346 = vmatprep.subr.mxu0 0.0
  %347 = vmatpush2.msra.mxu0 0.0
  %348 = vmatprep.mubr.f32.mxu0 0.0
  %349 = vmatmul.mubr.f32.gmra.mxu0 %v282
  %v350 = vpop.f32.mrf.mxu0
  %v351 = vadd.f32 %v280, %v350
  %v352 = vpop.f32.mrf.mxu0
  %353 = vdwg.mxu0
  %vm354 = vcmask 11264
  %355 = vst.msk [vmem:[%s5] sm:$0xf] %vm354, %v351
  // Predicated region
  $region22: #{tpu_custom_call.1} parent=0 // pred_check
    _
  $region23: #{tpu_custom_call.1} parent=0 // pred_check_branch
    %357 = sbr.rel (0) target = $region25
  $region24: #{tpu_custom_call.1} parent=0 // pred_region
    _
  $region25: #{tpu_custom_call.1} parent=0 // pred_fallthru
    _
  // Predicated region
  $region26: #{tpu_custom_call.1} parent=0 // pred_check
    _
  $region27: #{tpu_custom_call.1} parent=0 // pred_check_branch
    %359 = sbr.rel (0) target = $region29
  $region28: #{tpu_custom_call.1} parent=0 // pred_region
    _
  $region29: #{tpu_custom_call.1} parent=0 // pred_fallthru
    _

</llo_original>
